<compile_context>
chip_gen: v5e
topology: v5e:2x2
jax: 0.10.0
libtpu: 0.0.40
codegen_flags: <defaults>
</compile_context>

<pallas_src>
import jax
import jax.numpy as jnp
from jax.experimental import pallas as pl
from jax.experimental.pallas import tpu as pltpu


def actor_critic_kernel(state_ref, w1_ref, b1_ref, w2_ref, b2_ref, out_ref):
    """Fused actor+critic forward for one batch tile.

    state_ref: [TB, S]
    w1_ref:    [S, 2H]    (actor-l1 | critic-l1 concatenated along the output dim)
    b1_ref:    [1, 2H]
    w2_ref:    [2H, A+1]  (block-diagonal: actor-l2 in [:H, :A], critic-l2 in [H:, A:])
    b2_ref:    [1, A+1]
    out_ref:   [TB, A+1]  (cols 0..A-1 = softmax probs, col A = value)
    """
    x = state_ref[...]

    # Layer 1 for both branches in one lane-dense matmul, then ReLU.
    h = jnp.dot(x, w1_ref[...], preferred_element_type=jnp.float32) + b1_ref[...]
    h = jnp.maximum(h, 0.0)

    # Layer 2 (block-diagonal): one matmul yields [logits | value].
    z = jnp.dot(h, w2_ref[...], preferred_element_type=jnp.float32) + b2_ref[...]

    a = out_ref.shape[-1] - 1
    col = jax.lax.broadcasted_iota(jnp.int32, z.shape, dimension=1)
    is_logit = col < a

    # Numerically-stable softmax over the logit columns only (value column excluded
    # from both the max and the sum: exp(-inf) == 0).
    masked = jnp.where(is_logit, z, -jnp.inf)
    m = jnp.max(masked, axis=-1, keepdims=True)
    e = jnp.exp(masked - m)
    denom = jnp.sum(e, axis=-1, keepdims=True)
    r = pl.reciprocal(denom, approx=True)         # EUP vrcp slot (otherwise idle)
    r = r * (2.0 - denom * r)                     # one Newton step -> ~full f32 accuracy

    out_ref[...] = jnp.where(is_logit, e * r, z).astype(out_ref.dtype)


def fuse_params(params):
    """Build fused weights: W1 [S,2H], b1 [1,2H], W2 [2H,A+1], b2 [1,A+1]."""
    wa1, ba1 = params["wa1"], params["ba1"]   # [S,H], [1,H]
    wc1, bc1 = params["wc1"], params["bc1"]   # [S,H], [1,H]
    wa2, ba2 = params["wa2"], params["ba2"]   # [H,A], [1,A]
    wc2, bc2 = params["wc2"], params["bc2"]   # [H,1], [1,1]
    H = wa1.shape[1]
    A = wa2.shape[1]
    w1 = jnp.concatenate([wa1, wc1], axis=1)                      # [S, 2H]
    b1 = jnp.concatenate([ba1, bc1], axis=1)                      # [1, 2H]
    w2 = jnp.zeros((2 * H, A + 1), wa2.dtype)
    w2 = w2.at[:H, :A].set(wa2)
    w2 = w2.at[H:, A:].set(wc2)                                   # [2H, A+1]
    b2 = jnp.concatenate([ba2, bc2], axis=1)                      # [1, A+1]
    return w1, b1, w2, b2


def actor_critic_forward(state, params, *, block_b=1024):
    """state: [B, state_size] float32. Returns (action_probs [B,A], value [B,1])."""
    B, S = state.shape
    w1, b1, w2, b2 = fuse_params(params)
    H2 = w1.shape[1]          # 2 * hidden
    A1 = w2.shape[1]          # action_size + 1
    A = A1 - 1

    # Batch tile: whole batch if small, else 1024-row tiles (multiple of 8 sublanes);
    # Pallas handles the trailing partial block (garbage rows computed but never stored).
    tb = B if B <= block_b else block_b
    nb = pl.cdiv(B, tb)

    cost = pl.CostEstimate(
        flops=2 * B * (S * H2 + H2 * A1),
        transcendentals=B * A1,
        bytes_accessed=4 * (B * S + S * H2 + H2 + H2 * A1 + A1 + B * A1),
    )

    out = pl.pallas_call(
        actor_critic_kernel,
        out_shape=jax.ShapeDtypeStruct((B, A1), jnp.float32),
        grid=(nb,),
        in_specs=[
            pl.BlockSpec((tb, S), lambda i: (i, 0)),     # state: batch-blocked
            pl.BlockSpec((S, H2), lambda i: (0, 0)),     # weights: VMEM-resident across steps
            pl.BlockSpec((1, H2), lambda i: (0, 0)),
            pl.BlockSpec((H2, A1), lambda i: (0, 0)),
            pl.BlockSpec((1, A1), lambda i: (0, 0)),
        ],
        out_specs=pl.BlockSpec((tb, A1), lambda i: (i, 0)),
        compiler_params=pltpu.CompilerParams(dimension_semantics=("parallel",)),
        cost_estimate=cost,
    )(state, w1, b1, w2, b2)

    return out[:, :A], out[:, A:]


def init_params(key, state_size, action_size, hidden=64):
    """Deterministic init mirroring PyTorch Linear; stored pre-transposed [in, out]."""
    ks = jax.random.split(key, 8)

    def lin(kw, kb, fan_in, fan_out):
        bound = 1.0 / jnp.sqrt(float(fan_in))
        w = jax.random.uniform(kw, (fan_in, fan_out), jnp.float32, -bound, bound)
        b = jax.random.uniform(kb, (1, fan_out), jnp.float32, -bound, bound)
        return w, b

    wa1, ba1 = lin(ks[0], ks[1], state_size, hidden)
    wa2, ba2 = lin(ks[2], ks[3], hidden, action_size)
    wc1, bc1 = lin(ks[4], ks[5], state_size, hidden)
    wc2, bc2 = lin(ks[6], ks[7], hidden, 1)
    return dict(wa1=wa1, ba1=ba1, wa2=wa2, ba2=ba2,
                wc1=wc1, bc1=bc1, wc2=wc2, bc2=bc2)


if __name__ == "__main__":
    key = jax.random.PRNGKey(0)
    k_state, k_params = jax.random.split(key)

    B, STATE, ACTION = 8, 16, 4
    state = jax.random.normal(k_state, (B, STATE), jnp.float32)
    params = init_params(k_params, STATE, ACTION, hidden=64)

    probs, value = actor_critic_forward(state, params)
    jax.block_until_ready((probs, value))

    # Pure-JAX reference on the original (unfused) parameters.
    def ref(x, p):
        h_a = jnp.maximum(x @ p["wa1"] + p["ba1"], 0.0)
        pa = jax.nn.softmax(h_a @ p["wa2"] + p["ba2"], axis=-1)
        h_c = jnp.maximum(x @ p["wc1"] + p["bc1"], 0.0)
        v = h_c @ p["wc2"] + p["bc2"]
        return pa, v

    ref_probs, ref_value = ref(state, params)
    assert probs.shape == (B, ACTION) and value.shape == (B, 1)
    assert jnp.allclose(probs, ref_probs, atol=1e-5, rtol=1e-5)
    assert jnp.allclose(value, ref_value, atol=1e-5, rtol=1e-5)
    assert jnp.allclose(jnp.sum(probs, axis=-1), 1.0, atol=1e-5)

    print("KERNEL_OK")
</pallas_src>

<mosaic_0001>
module attributes {stable_mosaic.version = 11 : i64} {
  func.func @actor_critic_kernel(%arg0: i32, %arg1: memref<8x16xf32, #tpu.memory_space<vmem>>, %arg2: memref<16x128xf32, #tpu.memory_space<vmem>>, %arg3: memref<1x128xf32, #tpu.memory_space<vmem>>, %arg4: memref<128x5xf32, #tpu.memory_space<vmem>>, %arg5: memref<1x5xf32, #tpu.memory_space<vmem>>, %arg6: memref<8x5xf32, #tpu.memory_space<vmem>>) attributes {dimension_semantics = [#tpu.dimension_semantics<parallel>], iteration_bounds = array<i64: 1>, scalar_prefetch = 0 : i64, scratch_operands = 0 : i64, tpu.core_type = #tpu.core_type<tc>, window_params = [{transform_indices = @transform_0, window_bounds = array<i64: 8, 16>}, {pipeline_mode = #tpu.pipeline_mode<synchronous>, transform_indices = @transform_1, window_bounds = array<i64: 16, 128>}, {pipeline_mode = #tpu.pipeline_mode<synchronous>, transform_indices = @transform_2, window_bounds = array<i64: 1, 128>}, {pipeline_mode = #tpu.pipeline_mode<synchronous>, transform_indices = @transform_3, window_bounds = array<i64: 128, 5>}, {pipeline_mode = #tpu.pipeline_mode<synchronous>, transform_indices = @transform_4, window_bounds = array<i64: 1, 5>}, {transform_indices = @transform_5, window_bounds = array<i64: 8, 5>}]} {
    %c0 = arith.constant 0 : index
    %c0_0 = arith.constant 0 : index
    %0 = vector.load %arg1[%c0, %c0_0] : memref<8x16xf32, #tpu.memory_space<vmem>>, vector<8x16xf32>
    %c0_1 = arith.constant 0 : index
    %c0_2 = arith.constant 0 : index
    %1 = vector.load %arg2[%c0_1, %c0_2] : memref<16x128xf32, #tpu.memory_space<vmem>>, vector<16x128xf32>
    %cst = arith.constant dense<0.000000e+00> : vector<8x128xf32>
    %2 = tpu.matmul %0, %1, %cst {dimension_numbers = #tpu.dot_dimension_numbers<[1], [0], [0], [1], [0, 0, 1, 1], [], []>} : vector<8x16xf32>, vector<16x128xf32>, vector<8x128xf32> -> vector<8x128xf32>
    %c0_3 = arith.constant 0 : index
    %c0_4 = arith.constant 0 : index
    %3 = vector.load %arg3[%c0_3, %c0_4] : memref<1x128xf32, #tpu.memory_space<vmem>>, vector<1x128xf32>
    %4 = vector.broadcast %3 : vector<1x128xf32> to vector<8x128xf32>
    %5 = arith.addf %2, %4 : vector<8x128xf32>
    %cst_5 = arith.constant 0.000000e+00 : f32
    %6 = vector.broadcast %cst_5 : f32 to vector<8x128xf32>
    %7 = arith.maximumf %5, %6 : vector<8x128xf32>
    %c0_6 = arith.constant 0 : index
    %c0_7 = arith.constant 0 : index
    %8 = vector.load %arg4[%c0_6, %c0_7] : memref<128x5xf32, #tpu.memory_space<vmem>>, vector<128x5xf32>
    %cst_8 = arith.constant dense<0.000000e+00> : vector<8x5xf32>
    %9 = tpu.matmul %7, %8, %cst_8 {dimension_numbers = #tpu.dot_dimension_numbers<[1], [0], [0], [1], [0, 0, 1, 1], [], []>} : vector<8x128xf32>, vector<128x5xf32>, vector<8x5xf32> -> vector<8x5xf32>
    %c0_9 = arith.constant 0 : index
    %c0_10 = arith.constant 0 : index
    %10 = vector.load %arg5[%c0_9, %c0_10] : memref<1x5xf32, #tpu.memory_space<vmem>>, vector<1x5xf32>
    %11 = vector.broadcast %10 : vector<1x5xf32> to vector<8x5xf32>
    %12 = arith.addf %9, %11 : vector<8x5xf32>
    %13 = tpu.iota {dimensions = array<i32: 1>} : vector<8x5xi32>
    %c4_i32 = arith.constant 4 : i32
    %14 = vector.broadcast %c4_i32 : i32 to vector<8x5xi32>
    %15 = arith.cmpi slt, %13, %14 : vector<8x5xi32>
    %cst_11 = arith.constant 0xFF800000 : f32
    %16 = vector.broadcast %cst_11 : f32 to vector<8x5xf32>
    %17 = arith.select %15, %12, %16 : vector<8x5xi1>, vector<8x5xf32>
    %cst_12 = arith.constant dense<0xFF800000> : vector<8xf32>
    %18 = vector.multi_reduction <maximumf>, %17, %cst_12 [1] : vector<8x5xf32> to vector<8xf32>
    %19 = vector.shape_cast %18 : vector<8xf32> to vector<8x1xf32>
    %20 = vector.broadcast %19 : vector<8x1xf32> to vector<8x5xf32>
    %21 = arith.subf %17, %20 : vector<8x5xf32>
    %22 = math.exp %21 : vector<8x5xf32>
    %cst_13 = arith.constant dense<0.000000e+00> : vector<8xf32>
    %23 = vector.multi_reduction <add>, %22, %cst_13 [1] : vector<8x5xf32> to vector<8xf32>
    %24 = vector.shape_cast %23 : vector<8xf32> to vector<8x1xf32>
    %25 = tpu.reciprocal %24 {approx = true} : vector<8x1xf32> -> vector<8x1xf32>
    %26 = arith.mulf %24, %25 : vector<8x1xf32>
    %cst_14 = arith.constant 2.000000e+00 : f32
    %27 = vector.broadcast %cst_14 : f32 to vector<8x1xf32>
    %28 = arith.subf %27, %26 : vector<8x1xf32>
    %29 = arith.mulf %25, %28 : vector<8x1xf32>
    %30 = vector.broadcast %29 : vector<8x1xf32> to vector<8x5xf32>
    %31 = arith.mulf %22, %30 : vector<8x5xf32>
    %32 = arith.select %15, %31, %12 : vector<8x5xi1>, vector<8x5xf32>
    %c0_15 = arith.constant 0 : index
    %c0_16 = arith.constant 0 : index
    %33 = vector.load %arg6[%c0_15, %c0_16] : memref<8x5xf32, #tpu.memory_space<vmem>>, vector<8x5xf32>
    tpu.vector_store %arg6[%c0_15, %c0_16], %32 {strides = array<i32>} : memref<8x5xf32, #tpu.memory_space<vmem>>, vector<8x5xf32>,
    return
  }
  func.func @transform_0(%arg0: i32) -> (i32, i32) {
    %c0_i32 = arith.constant 0 : i32
    %c0_i32_0 = arith.constant 0 : i32
    return %arg0, %c0_i32 : i32, i32
  }
  func.func @transform_1(%arg0: i32) -> (i32, i32) {
    %c0_i32 = arith.constant 0 : i32
    %c0_i32_0 = arith.constant 0 : i32
    %c0_i32_1 = arith.constant 0 : i32
    return %c0_i32, %c0_i32_0 : i32, i32
  }
  func.func @transform_2(%arg0: i32) -> (i32, i32) {
    %c0_i32 = arith.constant 0 : i32
    %c0_i32_0 = arith.constant 0 : i32
    %c0_i32_1 = arith.constant 0 : i32
    return %c0_i32, %c0_i32_0 : i32, i32
  }
  func.func @transform_3(%arg0: i32) -> (i32, i32) {
    %c0_i32 = arith.constant 0 : i32
    %c0_i32_0 = arith.constant 0 : i32
    %c0_i32_1 = arith.constant 0 : i32
    return %c0_i32, %c0_i32_0 : i32, i32
  }
  func.func @transform_4(%arg0: i32) -> (i32, i32) {
    %c0_i32 = arith.constant 0 : i32
    %c0_i32_0 = arith.constant 0 : i32
    %c0_i32_1 = arith.constant 0 : i32
    return %c0_i32, %c0_i32_0 : i32, i32
  }
  func.func @transform_5(%arg0: i32) -> (i32, i32) {
    %c0_i32 = arith.constant 0 : i32
    %c0_i32_0 = arith.constant 0 : i32
    return %arg0, %c0_i32 : i32, i32
  }
}

</mosaic_0001>

<llo_original>
// kernel: tpu_custom_call.1
$region0: #{tpu_custom_call.1}
  #allocation0 [shape = 'u32[]', space=smem, size = 0x4, offset = 0x4, fixed_abs, tag = 'smem constant byte address 0x4 - core index']
  #allocation1 [shape = 'u32[72,128]{1,0:T(1,128)}', space=vmem, size = 0x9000, scoped, tag = 'internal scratch']
  %s0 = inlined_call_operand.vmem [shape: f32[8,16], index: 0, kind: input, shape index: {}]
  %s1 = inlined_call_operand.vmem [shape: f32[16,128], index: 1, kind: input, shape index: {}]
  %s2 = inlined_call_operand.vmem [shape: f32[1,128], index: 2, kind: input, shape index: {}]
  %s3 = inlined_call_operand.vmem [shape: f32[128,5], index: 3, kind: input, shape index: {}]
  %s4 = inlined_call_operand.vmem [shape: f32[1,5], index: 4, kind: input, shape index: {}]
  %s5 = inlined_call_operand.hbm [shape: f32[8,5], index: 5, kind: output, shape index: {}]
  %s6 = sld [smem:[#allocation0]]
  $region30: #{tpu_custom_call.1} parent=0
    _
  %s8 = ssub.s32 1, %s6
  %s9 = scalar_select 0, %s8, %s6
  $region1: #{tpu_custom_call.1} parent=0
    #allocation2 [shape = 'u8[4096]{0}', space=vmem, size = 0x1000, scoped, tag = 'output window, operand 0, single buffered']
    #allocation3 [shape = 's32[1]{0}', space=sflag, size = 0x4, scoped, tag = 'scoped memory for tpu_custom_call.1']
    %10 = vsyncpa [#allocation3], 0
    // Predicated region
    $region2: #{tpu_custom_call.1} parent=1 // pred_check
      _
    $region3: #{tpu_custom_call.1} parent=1 // pred_check_branch
      %12 = sbr.rel (0) target = $region5
    $region4: #{tpu_custom_call.1} parent=1 // pred_region
      _
    $region5: #{tpu_custom_call.1} parent=1 // pred_fallthru
      _
    // Predicated region
    $region6: #{tpu_custom_call.1} parent=1 // pred_check
      _
    $region7: #{tpu_custom_call.1} parent=1 // pred_check_branch
      %14 = sbr.rel (0) target = $region9
    $region8: #{tpu_custom_call.1} parent=1 // pred_region
      _
    $region9: #{tpu_custom_call.1} parent=1 // pred_fallthru
      _
    // Predicated region
    $region10: #{tpu_custom_call.1} parent=1 // pred_check
      _
    $region11: #{tpu_custom_call.1} parent=1 // pred_check_branch
      %16 = sbr.rel (0) target = $region13
    $region12: #{tpu_custom_call.1} parent=1 // pred_region
      _
    $region13: #{tpu_custom_call.1} parent=1 // pred_fallthru
      _
    // Predicated region
    $region14: #{tpu_custom_call.1} parent=1 // pred_check
      _
    $region15: #{tpu_custom_call.1} parent=1 // pred_check_branch
      %18 = sbr.rel (0) target = $region17
    $region16: #{tpu_custom_call.1} parent=1 // pred_region
      _
    $region17: #{tpu_custom_call.1} parent=1 // pred_fallthru
      _
    // Predicated region
    $region18: #{tpu_custom_call.1} parent=1 // pred_check
      _
    $region19: #{tpu_custom_call.1} parent=1 // pred_check_branch
      %20 = sbr.rel (0) target = $region21
    $region20: #{tpu_custom_call.1} parent=1 // pred_region
      _
    $region21: #{tpu_custom_call.1} parent=1 // pred_fallthru
      _
    %v21 = vld [vmem:[%s0] sm:$0xff]
    %v22 = vld [vmem:[%s1] sm:$0xff]
    %v23 = vld [vmem:[%s1 + $0x8] sm:$0xff]
    %v24 = vld [vmem:[%s2] sm:$0x1]
    %v26 = vperm.slane %v24, 0
    %vm28 = vcmask 130048
    %v30 = vsel %vm28, %v21, 0
    %32 = vmatpush.msra.mxu0 0.0
    %33 = vmatpush.msra.mxu0 0.0
    %34 = vmatpush.msra.mxu0 0.0
    %35 = vmatpush.msra.mxu0 0.0
    %36 = vmatpush.msra.mxu0 0.0
    %37 = vmatpush.msra.mxu0 0.0
    %38 = vmatpush.msra.mxu0 0.0
    %39 = vmatpush.msra.mxu0 0.0
    %40 = vmatpush.msra.mxu0 0.0
    %41 = vmatpush.msra.mxu0 0.0
    %42 = vmatpush.msra.mxu0 0.0
    %43 = vmatpush.msra.mxu0 0.0
    %44 = vmatpush.msra.mxu0 0.0
    %45 = vmatpush.msra.mxu0 0.0
    %46 = vmatpush.msra.mxu0 %v23
    %47 = vmatpush.msra.mxu0 %v22
    %48 = vmatmul.f32.gmra.mxu0 %v30
    %v49 = vpop.f32.mrf.mxu0
    %v50 = vadd.f32 %v26, %v49
    %51 = vdwg.mxu0
    %v52 = vmax.f32 %v50, 0.0
    %v53 = vld [vmem:[%s3] sm:$0xff]
    %v54 = vld [vmem:[%s3 + $0x8] sm:$0xff]
    %v55 = vld [vmem:[%s3 + $0x10] sm:$0xff]
    %v56 = vld [vmem:[%s3 + $0x18] sm:$0xff]
    %v57 = vld [vmem:[%s3 + $0x20] sm:$0xff]
    %v58 = vld [vmem:[%s3 + $0x28] sm:$0xff]
    %v59 = vld [vmem:[%s3 + $0x30] sm:$0xff]
    %v60 = vld [vmem:[%s3 + $0x38] sm:$0xff]
    %v61 = vld [vmem:[%s3 + $0x40] sm:$0xff]
    %v62 = vld [vmem:[%s3 + $0x48] sm:$0xff]
    %v63 = vld [vmem:[%s3 + $0x50] sm:$0xff]
    %v64 = vld [vmem:[%s3 + $0x58] sm:$0xff]
    %v65 = vld [vmem:[%s3 + $0x60] sm:$0xff]
    %v66 = vld [vmem:[%s3 + $0x68] sm:$0xff]
    %v67 = vld [vmem:[%s3 + $0x70] sm:$0xff]
    %v68 = vld [vmem:[%s3 + $0x78] sm:$0xff]
    %v69 = vld [vmem:[%s4] sm:$0x1]
    %v71 = vperm.slane %v69, 0
    %73 = vmatpush.msra.mxu0 %v68
    %74 = vmatpush.msra.mxu0 %v67
    %75 = vmatpush.msra.mxu0 %v66
    %76 = vmatpush.msra.mxu0 %v65
    %77 = vmatpush.msra.mxu0 %v64
    %78 = vmatpush.msra.mxu0 %v63
    %79 = vmatpush.msra.mxu0 %v62
    %80 = vmatpush.msra.mxu0 %v61
    %81 = vmatpush.msra.mxu0 %v60
    %82 = vmatpush.msra.mxu0 %v59
    %83 = vmatpush.msra.mxu0 %v58
    %84 = vmatpush.msra.mxu0 %v57
    %85 = vmatpush.msra.mxu0 %v56
    %86 = vmatpush.msra.mxu0 %v55
    %87 = vmatpush.msra.mxu0 %v54
    %88 = vmatpush.msra.mxu0 %v53
    %89 = vmatmul.f32.gmra.mxu0 %v52
    %v90 = vpop.f32.mrf.mxu0
    %v91 = vadd.f32 %v71, %v90
    %92 = vdwg.mxu0
    %v93 = vlaneseq
    %v94 = vand.u32 %v93, 127
    %vm95 = vcmp.lt.s32.totalorder %v94, 4
    %v96 = vsel %vm95, %v91, -inf
    %vm97 = vcmask 39936
    %v98 = vsel %vm97, %v96, -inf
    %99 = vmax.xlane.f32.xlu0 %v98
    %v100 = vpop.xlane.xlu0 %99
    %v101 = vsub.f32 %v96, %v100
    %v102 = vmul.f32 %v101, 1.442695
    %v103 = vpow.pop %v102
    %v104 = vsel %vm97, %v103, 0.0
    %105 = vadd.xlane.f32.xlu0 %v104
    %v106 = vpop.xlane.xlu0 %105
    %v107 = vrcp.pop %v106
    %v108 = vmul.f32 %v106, %v107
    %v109 = vsub.f32 2.0, %v108
    %v110 = vmul.f32 %v107, %v109
    %v111 = vmul.f32 %v103, %v110
    %v112 = vsel %vm95, %v111, %v91
    %113 = vst.msk [vmem:[#allocation2] sm:$0xff] %vm97, %v112
    // Predicated region
    $region22: #{tpu_custom_call.1} parent=1 // pred_check
      _
    $region23: #{tpu_custom_call.1} parent=1 // pred_check_branch
      %115 = sbr.rel (0) target = $region25
    $region24: #{tpu_custom_call.1} parent=1 // pred_region
      %117 = vsyncadd [#allocation3], 0
      %s119 = sshll.u32 [#allocation2], 4
      %s120 = int_to_ptr.vmem [resolvable:$true] %s119
      %s121 = sshll.u32 %s5, 4
      %s122 = int_to_ptr.hbm [resolvable:$true] %s121
      %124 = dma.vmem_to_hbm [thread:$0]  %s120, 128, %s122, [#allocation3]
    $region25: #{tpu_custom_call.1} parent=1 // pred_fallthru
      _
    // Predicated region
    $region26: #{tpu_custom_call.1} parent=1 // pred_check
      _
    $region27: #{tpu_custom_call.1} parent=1 // pred_check_branch
      %126 = sbr.rel (0) target = $region29
    $region28: #{tpu_custom_call.1} parent=1 // pred_region
      %128 = dma.done [#allocation3], 128
    $region29: #{tpu_custom_call.1} parent=1 // pred_fallthru
      _
    %129 = vsyncpa [#allocation3], 1

</llo_original>
